<compile_context>
chip_gen: v7x
topology: tpu7x:2x2x1
jax: 0.10.0
libtpu: 0.0.40
codegen_flags: <defaults>
</compile_context>

<pallas_src>
import functools
import math

import jax
import jax.numpy as jnp
from jax.experimental import pallas as pl
from jax.experimental.pallas import tpu as pltpu


def _layernorm_kernel(x_ref, gamma_ref, beta_ref, o_ref, *, eps, hidden):
    # x_ref: (TM, H) tile of rows; gamma/beta: (1, H), broadcast over rows.
    x = x_ref[...].astype(jnp.float32)

    # Single-pass moments: one read of the tile produces both sums. var is
    # clamped >= 0 to guard against cancellation; accumulation is f32.
    inv_n = jnp.float32(1.0 / hidden)
    mean = jnp.sum(x, axis=-1, keepdims=True) * inv_n
    mean_sq = jnp.sum(x * x, axis=-1, keepdims=True) * inv_n
    var_biased = jnp.maximum(mean_sq - mean * mean, jnp.float32(0.0))

    # Unbiased (ddof=1) correction, like torch.Tensor.std default. Guard N=1.
    corr = jnp.float32(hidden / max(hidden - 1, 1))
    std = jnp.sqrt(var_biased * corr)
    denom = std + jnp.float32(eps)

    # EUP approximate reciprocal (free slot in this DMA-bound kernel) followed
    # by one Newton-Raphson step on the VPU -> effectively full f32 accuracy.
    inv = pl.reciprocal(denom, approx=True)
    inv = inv * (jnp.float32(2.0) - denom * inv)

    gamma = gamma_ref[...].astype(jnp.float32)
    beta = beta_ref[...].astype(jnp.float32)

    # (x - mean) recomputed inline in the store expression; no centered copy
    # is kept live across the reduction.
    o_ref[...] = (gamma * ((x - mean) * inv) + beta).astype(o_ref.dtype)


def _round_up(n, m):
    return ((n + m - 1) // m) * m


def _cdiv(a, b):
    return -(-a // b)


def _vmem_config():
    """Generation-aware (heuristic_budget, vmem_limit_bytes)."""
    mib = 1024 * 1024
    try:
        cap = int(getattr(pltpu.get_tpu_info(), "vmem_capacity_bytes"))
    except Exception:
        cap = 64 * mib  # conservative fallback: size for v7x-class VMEM
    if cap >= 96 * mib:
        # v5e / v6e: 128 MiB physical VMEM -> be generous.
        return 64 * mib, 80 * mib
    # v7x: 64 MiB per-TC VMEM -> stay well inside it.
    return 40 * mib, 48 * mib


def _pick_block_rows(rows, hidden, dtype, budget):
    """Largest row tile whose full footprint (double-buffered HBM-dtype in+out
    tiles plus in-kernel f32 intermediates) fits `budget`, capped by a byte
    target per tile and kept small enough that the grid has >= 2 steps."""
    itemsize = jnp.dtype(dtype).itemsize
    # Sublane packing: 8 rows per vreg for 4-byte dtypes, 16 for 2-byte, 32 for 1-byte.
    pack = 8 * max(1, 4 // itemsize)

    # Per-row footprint:
    #   2 x double-buffered input tile + 2 x double-buffered output tile (HBM dtype)
    #   + ~3 (TM, H) f32 intermediates materialized by the kernel body.
    per_row_bytes = (4 * itemsize + 12) * hidden
    cap = max(pack, budget // per_row_bytes)

    # Diminishing-returns cap: ~8 MiB per (single) buffered input tile already
    # reaches the HBM roofline; beyond that is wasted VMEM.
    tile_target_rows = (8 * 1024 * 1024) // max(1, hidden * itemsize)
    cap = min(cap, max(pack, tile_target_rows))

    # Keep the grid >= 2 steps whenever the problem spans more than one vreg
    # of rows, so both v7x TensorCores get work under "parallel" semantics.
    if rows > pack:
        cap = min(cap, _round_up(_cdiv(rows, 2), pack))

    cap = min(cap, _round_up(rows, pack))     # never larger than the problem
    return int(max(pack, (cap // pack) * pack))


def layer_norm(x, a2, b2, eps=1e-6, block_rows=None):
    """x: (..., hidden). a2/b2: (hidden,). Returns same shape/dtype as x."""
    orig_shape = x.shape
    hidden = orig_shape[-1]
    rows = int(math.prod(orig_shape[:-1])) if len(orig_shape) > 1 else 1

    x2 = x.reshape(rows, hidden)
    gamma = a2.reshape(1, hidden)
    beta = b2.reshape(1, hidden)

    budget, vmem_limit = _vmem_config()
    if block_rows is None:
        block_rows = _pick_block_rows(rows, hidden, x.dtype, budget)

    grid = (pl.cdiv(rows, block_rows),)

    itemsize = jnp.dtype(x.dtype).itemsize
    cost = pl.CostEstimate(
        flops=9 * rows * hidden,
        transcendentals=2 * rows,
        bytes_accessed=2 * rows * hidden * itemsize + 2 * hidden * itemsize,
    )

    out = pl.pallas_call(
        functools.partial(_layernorm_kernel, eps=eps, hidden=hidden),
        out_shape=jax.ShapeDtypeStruct((rows, hidden), x.dtype),
        grid_spec=pltpu.PrefetchScalarGridSpec(
            num_scalar_prefetch=0,
            grid=grid,
            in_specs=[
                pl.BlockSpec((block_rows, hidden), lambda i: (i, 0)),
                pl.BlockSpec((1, hidden), lambda i: (0, 0)),
                pl.BlockSpec((1, hidden), lambda i: (0, 0)),
            ],
            out_specs=pl.BlockSpec((block_rows, hidden), lambda i: (i, 0)),
        ),
        compiler_params=pltpu.CompilerParams(
            dimension_semantics=("parallel",),     # megacore sharding (v7x)
            vmem_limit_bytes=vmem_limit,           # generation-aware
        ),
        cost_estimate=cost,
    )(x2, gamma, beta)

    return out.reshape(orig_shape)


if __name__ == "__main__":
    key = jax.random.PRNGKey(0)
    eps = 1e-6

    def ref_ln(x, a2, b2):
        mean = jnp.mean(x, axis=-1, keepdims=True)
        std = jnp.std(x, axis=-1, keepdims=True, ddof=1)
        return a2 * (x - mean) / (std + eps) + b2

    # Lane-dense hidden (multiple of 128) keeps stores unmasked on all chips.
    batch, seq, hidden = 2, 8, 128
    k1, k2 = jax.random.split(key)

    x = jax.random.normal(k1, (batch, seq, hidden), dtype=jnp.float32)
    # Deterministic params matching nn.Parameter(torch.ones/zeros(feature)).
    a2 = jnp.ones((hidden,), dtype=jnp.float32)
    b2 = jnp.zeros((hidden,), dtype=jnp.float32)

    out = jax.block_until_ready(layer_norm(x, a2, b2, eps=eps))
    assert out.shape == x.shape and out.dtype == x.dtype
    assert jnp.allclose(out, ref_ln(x, a2, b2), atol=1e-4, rtol=1e-4), "mismatch (even case)"

    # Ragged row count: exercises the partial last block (no host-side pad).
    x_ragged = jax.random.normal(k2, (3, 7, hidden), dtype=jnp.float32)
    out_ragged = jax.block_until_ready(layer_norm(x_ragged, a2, b2, eps=eps))
    assert out_ragged.shape == x_ragged.shape
    assert jnp.allclose(out_ragged, ref_ln(x_ragged, a2, b2), atol=1e-4, rtol=1e-4), \
        "mismatch (ragged case)"

    print("KERNEL_OK")
</pallas_src>

<mosaic_0001>
module attributes {stable_mosaic.version = 11 : i64} {
  func.func @_layernorm_kernel(%arg0: i32, %arg1: memref<8x128xf32, #tpu.memory_space<vmem>>, %arg2: memref<1x128xf32, #tpu.memory_space<vmem>>, %arg3: memref<1x128xf32, #tpu.memory_space<vmem>>, %arg4: memref<8x128xf32, #tpu.memory_space<vmem>>) attributes {dimension_semantics = [#tpu.dimension_semantics<parallel>], iteration_bounds = array<i64: 2>, scalar_prefetch = 0 : i64, scratch_operands = 0 : i64, tpu.core_type = #tpu.core_type<tc>, window_params = [{transform_indices = @transform_0, window_bounds = array<i64: 8, 128>}, {pipeline_mode = #tpu.pipeline_mode<synchronous>, transform_indices = @transform_1, window_bounds = array<i64: 1, 128>}, {pipeline_mode = #tpu.pipeline_mode<synchronous>, transform_indices = @transform_2, window_bounds = array<i64: 1, 128>}, {transform_indices = @transform_3, window_bounds = array<i64: 8, 128>}]} {
    %c0 = arith.constant 0 : index
    %c0_0 = arith.constant 0 : index
    %0 = vector.load %arg1[%c0, %c0_0] : memref<8x128xf32, #tpu.memory_space<vmem>>, vector<8x128xf32>
    %cst = arith.constant dense<0.000000e+00> : vector<8xf32>
    %1 = vector.multi_reduction <add>, %0, %cst [1] : vector<8x128xf32> to vector<8xf32>
    %2 = vector.shape_cast %1 : vector<8xf32> to vector<8x1xf32>
    %cst_1 = arith.constant 7.812500e-03 : f32
    %3 = vector.broadcast %cst_1 : f32 to vector<8x1xf32>
    %4 = arith.mulf %2, %3 : vector<8x1xf32>
    %5 = arith.mulf %0, %0 : vector<8x128xf32>
    %cst_2 = arith.constant dense<0.000000e+00> : vector<8xf32>
    %6 = vector.multi_reduction <add>, %5, %cst_2 [1] : vector<8x128xf32> to vector<8xf32>
    %7 = vector.shape_cast %6 : vector<8xf32> to vector<8x1xf32>
    %cst_3 = arith.constant 7.812500e-03 : f32
    %8 = vector.broadcast %cst_3 : f32 to vector<8x1xf32>
    %9 = arith.mulf %7, %8 : vector<8x1xf32>
    %10 = arith.mulf %4, %4 : vector<8x1xf32>
    %11 = arith.subf %9, %10 : vector<8x1xf32>
    %cst_4 = arith.constant 0.000000e+00 : f32
    %12 = vector.broadcast %cst_4 : f32 to vector<8x1xf32>
    %13 = arith.maximumf %11, %12 : vector<8x1xf32>
    %cst_5 = arith.constant 1.00787401 : f32
    %14 = vector.broadcast %cst_5 : f32 to vector<8x1xf32>
    %15 = arith.mulf %13, %14 : vector<8x1xf32>
    %16 = math.sqrt %15 : vector<8x1xf32>
    %cst_6 = arith.constant 9.99999997E-7 : f32
    %17 = vector.broadcast %cst_6 : f32 to vector<8x1xf32>
    %18 = arith.addf %16, %17 : vector<8x1xf32>
    %19 = tpu.reciprocal %18 {approx = true} : vector<8x1xf32> -> vector<8x1xf32>
    %20 = arith.mulf %18, %19 : vector<8x1xf32>
    %cst_7 = arith.constant 2.000000e+00 : f32
    %21 = vector.broadcast %cst_7 : f32 to vector<8x1xf32>
    %22 = arith.subf %21, %20 : vector<8x1xf32>
    %23 = arith.mulf %19, %22 : vector<8x1xf32>
    %c0_8 = arith.constant 0 : index
    %c0_9 = arith.constant 0 : index
    %24 = vector.load %arg2[%c0_8, %c0_9] : memref<1x128xf32, #tpu.memory_space<vmem>>, vector<1x128xf32>
    %c0_10 = arith.constant 0 : index
    %c0_11 = arith.constant 0 : index
    %25 = vector.load %arg3[%c0_10, %c0_11] : memref<1x128xf32, #tpu.memory_space<vmem>>, vector<1x128xf32>
    %26 = vector.broadcast %4 : vector<8x1xf32> to vector<8x128xf32>
    %27 = arith.subf %0, %26 : vector<8x128xf32>
    %28 = vector.broadcast %23 : vector<8x1xf32> to vector<8x128xf32>
    %29 = arith.mulf %27, %28 : vector<8x128xf32>
    %30 = vector.broadcast %24 : vector<1x128xf32> to vector<8x128xf32>
    %31 = arith.mulf %30, %29 : vector<8x128xf32>
    %32 = vector.broadcast %25 : vector<1x128xf32> to vector<8x128xf32>
    %33 = arith.addf %31, %32 : vector<8x128xf32>
    %c0_12 = arith.constant 0 : index
    %c0_13 = arith.constant 0 : index
    %34 = vector.load %arg4[%c0_12, %c0_13] : memref<8x128xf32, #tpu.memory_space<vmem>>, vector<8x128xf32>
    tpu.vector_store %arg4[%c0_12, %c0_13], %33 {strides = array<i32>} : memref<8x128xf32, #tpu.memory_space<vmem>>, vector<8x128xf32>,
    return
  }
  func.func @transform_0(%arg0: i32) -> (i32, i32) {
    %c0_i32 = arith.constant 0 : i32
    %c0_i32_0 = arith.constant 0 : i32
    return %arg0, %c0_i32 : i32, i32
  }
  func.func @transform_1(%arg0: i32) -> (i32, i32) {
    %c0_i32 = arith.constant 0 : i32
    %c0_i32_0 = arith.constant 0 : i32
    %c0_i32_1 = arith.constant 0 : i32
    return %c0_i32, %c0_i32_0 : i32, i32
  }
  func.func @transform_2(%arg0: i32) -> (i32, i32) {
    %c0_i32 = arith.constant 0 : i32
    %c0_i32_0 = arith.constant 0 : i32
    %c0_i32_1 = arith.constant 0 : i32
    return %c0_i32, %c0_i32_0 : i32, i32
  }
  func.func @transform_3(%arg0: i32) -> (i32, i32) {
    %c0_i32 = arith.constant 0 : i32
    %c0_i32_0 = arith.constant 0 : i32
    return %arg0, %c0_i32 : i32, i32
  }
}

</mosaic_0001>

<llo_original>
// kernel: tpu_custom_call.1
$region0: #{tpu_custom_call.1}
  #allocation0 [shape = 'u32[]', space=smem, size = 0x4, offset = 0x4, fixed_abs, tag = 'smem constant byte address 0x4 - core index']
  #allocation1 [shape = 'u32[144,128]{1,0:T(1,128)}', space=vmem, size = 0x12000, scoped, tag = 'internal scratch']
  %s0 = inlined_call_operand.hbm [shape: f32[16,128], index: 0, kind: input, shape index: {}]
  %s1 = inlined_call_operand.vmem [shape: f32[1,128], index: 1, kind: input, shape index: {}]
  %s2 = inlined_call_operand.vmem [shape: f32[1,128], index: 2, kind: input, shape index: {}]
  %s3 = inlined_call_operand.hbm [shape: f32[16,128], index: 3, kind: output, shape index: {}]
  %s4 = sld [smem:[#allocation0]]
  $region49: #{tpu_custom_call.1} parent=0
    _
  %s6 = ssub.s32 1, %s4
  %s7 = scalar_select 0, %s6, %s4
  $region1: #{tpu_custom_call.1} parent=0
    #allocation2 [shape = 'u8[8192]{0}', space=vmem, size = 0x2000, scoped, tag = 'input window, operand 0']
    #allocation3 [shape = 's32[2]{0}', space=sflag, size = 0x8, scoped, tag = 'scoped memory for tpu_custom_call.1']
    #allocation4 [shape = 's32[2]{0}', space=sflag, size = 0x8, scoped, tag = 'scoped memory for tpu_custom_call.1']
    #allocation5 [shape = 'u8[8192]{0}', space=vmem, size = 0x2000, scoped, tag = 'output window, operand 0']
    %8 = vsyncpa [#allocation3], 0
    %s9 = scalar_lea.sflag [#allocation3], 1
    %10 = vsyncpa %s9, 0
    %11 = vsyncpa [#allocation4], 0
    %s12 = scalar_lea.sflag [#allocation4], 1
    %13 = vsyncpa %s12, 0
    loop: start=0, step=1, limit=4
    $region2: #{tpu_custom_call.1} parent=1 // loop_pre_header
      _
    $region3: #{tpu_custom_call.1} parent=1 // loop_header
      %s15 = sphi 0, %s19
      %p16 = scmp.ge.s32.totalorder %s15, 4
      %s25 = sphi 0, %s27
      %s28 = sphi 0, %s25
      %s29 = sphi 0, %s28
      %s45 = sphi 0, %s29
      %s49 = sphi 0, %s49
      %s51 = sphi 0, %s49
      %s52 = sphi 0, %s51
      %s66 = sphi 0, %s52
      %s70 = sphi 0, %s70
      %s72 = sphi 0, %s70
      %s73 = sphi 0, %s72
      %s87 = sphi 0, %s73
      %s93 = sphi 0, %s95
      %s96 = sphi 0, %s93
      %s97 = sphi 0, %s96
      %s113 = sphi 0, %s97
    $region4: #{tpu_custom_call.1} parent=1 // loop_header_branch
      %18 = sbr.rel (%p16) target = $region8
    $region5: #{tpu_custom_call.1} parent=1 // loop_body
      %s20 = ssub.s32 %s15, 1
      %s21 = ssub.s32 %s15, 2
      %s22 = sadd.s32 %s15, 1
      %s23 = ssub.s32 %s15, %s22
      %p24 = scmp.eq.s32.totalorder %s23, 0
      %s26 = sadd.s32 %s25, 1
      %s27 = scalar_select %p24, %s25, %s26
      %p30 = pneg %p24
      %p31 = scmp.eq.s32.totalorder %s15, 1
      %p32 = por %p30, %p31
      %p33 = scmp.ne.s32.totalorder %s25, %s28
      %p34 = scmp.eq.s32.totalorder %s15, 0
      %p35 = por %p33, %p34
      %p36 = scmp.ne.s32.totalorder %s25, %s28
      %p37 = scmp.eq.s32.totalorder %s20, 1
      %p38 = por %p36, %p37
      %p39 = scmp.ne.s32.totalorder %s28, %s29
      %p40 = scmp.eq.s32.totalorder %s20, 0
      %p41 = por %p39, %p40
      %p42 = scmp.ne.s32.totalorder %s28, %s29
      %p43 = scmp.eq.s32.totalorder %s21, 1
      %p44 = por %p42, %p43
      %p46 = scmp.ne.s32.totalorder %s29, %s45
      %p47 = scmp.eq.s32.totalorder %s21, 0
      %p48 = por %p46, %p47
      %s50 = sadd.s32 %s49, 1
      %p53 = scmp.eq.s32.totalorder %s15, 1
      %p54 = scmp.ne.s32.totalorder %s49, %s51
      %p55 = scmp.eq.s32.totalorder %s15, 0
      %p56 = por %p54, %p55
      %p57 = scmp.ne.s32.totalorder %s49, %s51
      %p58 = scmp.eq.s32.totalorder %s20, 1
      %p59 = por %p57, %p58
      %p60 = scmp.ne.s32.totalorder %s51, %s52
      %p61 = scmp.eq.s32.totalorder %s20, 0
      %p62 = por %p60, %p61
      %p63 = scmp.ne.s32.totalorder %s51, %s52
      %p64 = scmp.eq.s32.totalorder %s21, 1
      %p65 = por %p63, %p64
      %p67 = scmp.ne.s32.totalorder %s52, %s66
      %p68 = scmp.eq.s32.totalorder %s21, 0
      %p69 = por %p67, %p68
      %s71 = sadd.s32 %s70, 1
      %p74 = scmp.eq.s32.totalorder %s15, 1
      %p75 = scmp.ne.s32.totalorder %s70, %s72
      %p76 = scmp.eq.s32.totalorder %s15, 0
      %p77 = por %p75, %p76
      %p78 = scmp.ne.s32.totalorder %s70, %s72
      %p79 = scmp.eq.s32.totalorder %s20, 1
      %p80 = por %p78, %p79
      %p81 = scmp.ne.s32.totalorder %s72, %s73
      %p82 = scmp.eq.s32.totalorder %s20, 0
      %p83 = por %p81, %p82
      %p84 = scmp.ne.s32.totalorder %s72, %s73
      %p85 = scmp.eq.s32.totalorder %s21, 1
      %p86 = por %p84, %p85
      %p88 = scmp.ne.s32.totalorder %s73, %s87
      %p89 = scmp.eq.s32.totalorder %s21, 0
      %p90 = por %p88, %p89
      %s91 = ssub.s32 %s15, %s22
      %p92 = scmp.eq.s32.totalorder %s91, 0
      %s94 = sadd.s32 %s93, 1
      %s95 = scalar_select %p92, %s93, %s94
      %p98 = pneg %p92
      %p99 = scmp.eq.s32.totalorder %s15, 1
      %p100 = por %p98, %p99
      %p101 = scmp.ne.s32.totalorder %s93, %s96
      %p102 = scmp.eq.s32.totalorder %s15, 0
      %p103 = por %p101, %p102
      %p104 = scmp.ne.s32.totalorder %s93, %s96
      %p105 = scmp.eq.s32.totalorder %s20, 1
      %p106 = por %p104, %p105
      %p107 = scmp.ne.s32.totalorder %s96, %s97
      %p108 = scmp.eq.s32.totalorder %s20, 0
      %p109 = por %p107, %p108
      %p110 = scmp.ne.s32.totalorder %s96, %s97
      %p111 = scmp.eq.s32.totalorder %s21, 1
      %p112 = por %p110, %p111
      %p114 = scmp.ne.s32.totalorder %s97, %s113
      %p115 = scmp.eq.s32.totalorder %s21, 0
      %p116 = por %p114, %p115
      %p117 = scmp.le.s32.totalorder 1, %s15
      %p118 = scmp.lt.s32.totalorder %s15, 3
      %p119 = pnand %p117, %p118
      %p120 = pneg %p119
      // Predicated region
      $region9: #{tpu_custom_call.1} parent=5 // pred_check
        _
      $region10: #{tpu_custom_call.1} parent=5 // pred_check_branch
        %122 = sbr.rel (%p119) target = $region12
      $region11: #{tpu_custom_call.1} parent=5 // pred_region
        %s123 = ssub.s32 %s15, 1
        // Predicated region
        $region13: #{tpu_custom_call.1} parent=11 // pred_check
          %p124 = pneg %p62
        $region14: #{tpu_custom_call.1} parent=11 // pred_check_branch
          %126 = sbr.rel (%p124) target = $region16
        $region15: #{tpu_custom_call.1} parent=11 // pred_region
          _
        $region16: #{tpu_custom_call.1} parent=11 // pred_fallthru
          _
        // Predicated region
        $region17: #{tpu_custom_call.1} parent=11 // pred_check
          %p127 = pneg %p83
        $region18: #{tpu_custom_call.1} parent=11 // pred_check_branch
          %129 = sbr.rel (%p127) target = $region20
        $region19: #{tpu_custom_call.1} parent=11 // pred_region
          _
        $region20: #{tpu_custom_call.1} parent=11 // pred_fallthru
          _
      $region12: #{tpu_custom_call.1} parent=5 // pred_fallthru
        _
      %p130 = scmp.lt.s32.totalorder %s15, 2
      // Predicated region
      $region21: #{tpu_custom_call.1} parent=5 // pred_check
        %p131 = pneg %p130
      $region22: #{tpu_custom_call.1} parent=5 // pred_check_branch
        %133 = sbr.rel (%p131) target = $region24
      $region23: #{tpu_custom_call.1} parent=5 // pred_region
        // Predicated region
        $region25: #{tpu_custom_call.1} parent=23 // pred_check
          %p134 = pneg %p35
        $region26: #{tpu_custom_call.1} parent=23 // pred_check_branch
          %136 = sbr.rel (%p134) target = $region28
        $region27: #{tpu_custom_call.1} parent=23 // pred_region
          %s137 = sand.u32 %s25, 1
          %s138 = scalar_lea.sflag [#allocation3], %s137
          %s139 = sand.u32 %s25, 1
          %s140 = smul.addr %s139, 8
          %s141 = scalar_lea.vmem [#allocation2], %s140
          %s143 = ssub.s32 128, 128
          %144 = vsyncadd %s138, %s143
          %s145 = smul.addr %s15, 128
          %s146 = scalar_lea.hbm %s0, %s145
          %s148 = sshll.u32 %s141, 4
          %s149 = int_to_ptr.vmem [resolvable:$true] %s148
          %151 = dma.hbm_to_vmem [thread:$0]  %s146, 128, %s149, %s138
        $region28: #{tpu_custom_call.1} parent=23 // pred_fallthru
          _
      $region24: #{tpu_custom_call.1} parent=5 // pred_fallthru
        _
      %p152 = scmp.le.s32.totalorder 1, %s15
      %p153 = scmp.lt.s32.totalorder %s15, 3
      %p154 = pnand %p152, %p153
      %p155 = pneg %p154
      // Predicated region
      $region29: #{tpu_custom_call.1} parent=5 // pred_check
        _
      $region30: #{tpu_custom_call.1} parent=5 // pred_check_branch
        %157 = sbr.rel (%p154) target = $region32
      $region31: #{tpu_custom_call.1} parent=5 // pred_region
        %s158 = ssub.s32 %s15, 1
        %s159 = sand.u32 %s28, 1
        %s160 = scalar_lea.sflag [#allocation3], %s159
        %s161 = sand.u32 %s28, 1
        %s162 = smul.addr %s161, 8
        %s163 = scalar_lea.vmem [#allocation2], %s162
        // Predicated region
        $region33: #{tpu_custom_call.1} parent=31 // pred_check
          %p164 = pneg %p41
        $region34: #{tpu_custom_call.1} parent=31 // pred_check_branch
          %166 = sbr.rel (%p164) target = $region36
        $region35: #{tpu_custom_call.1} parent=31 // pred_region
          %167 = dma.done %s160, 128
        $region36: #{tpu_custom_call.1} parent=31 // pred_fallthru
          _
        %s168 = sand.u32 %s28, 1
        %s169 = scalar_lea.sflag [#allocation3], %s168
        %s170 = sand.u32 %s28, 1
        %s171 = smul.addr %s170, 8
        %s172 = scalar_lea.vmem [#allocation2], %s171
        %p173 = pneg %p41
        %p174 = pneg %p38
        %p175 = pneg %p62
        %p176 = pneg %p59
        %p177 = pneg %p83
        %p178 = pneg %p80
        %p179 = pneg %p109
        %p180 = pneg %p106
        %s181 = sand.u32 %s96, 1
        %s182 = scalar_lea.sflag [#allocation4], %s181
        %s183 = sand.u32 %s96, 1
        %s184 = smul.addr %s183, 8
        %s185 = scalar_lea.vmem [#allocation5], %s184
        %v186 = vld [vmem:[%s163] sm:$0xff]
        %187 = vadd.xlane.f32.xlu0 %v186
        %v188 = vpop.xlane.xlu0 %187
        %v189 = vmul.f32 %v188, 0.0078125
        %v190 = vmul.f32 %v186, %v186
        %191 = vadd.xlane.f32.xlu0 %v190
        %v192 = vpop.xlane.xlu0 %191
        %v193 = vmul.f32 %v192, 0.0078125
        %v194 = vmul.f32 %v189, %v189
        %v195 = vsub.f32 %v193, %v194
        %v196 = vmax.f32 %v195, 0.0
        %v197 = vmul.f32 %v196, 1.007874
        %v198 = vrsqrt.pop %v197
        %v199 = vmul.f32 %v197, %v198
        %vm200 = vcmp.eq.f32.partialorder %v197, inf
        %v201 = vsel %vm200, %v197, %v199
        %vm202 = vcmp.eq.f32.partialorder %v197, 0.0
        %v203 = vand.u32 %v197, 2147483648
        %v204 = vsel %vm202, %v203, %v201
        %v205 = vadd.f32 %v204, 1e-06
        %v206 = vrcp.pop %v205
        %v207 = vmul.f32 %v205, %v206
        %v208 = vsub.f32 2.0, %v207
        %v209 = vmul.f32 %v206, %v208
        %v210 = vld [vmem:[%s1] sm:$0x1]
        %v211 = vld [vmem:[%s2] sm:$0x1]
        %v212 = vsub.f32 %v186, %v189
        %v213 = vmul.f32 %v212, %v209
        %v215 = vlaneseq
        %v216 = vshrl.u32 %v215, 7
        %v217 = vsub.s32 0, %v216
        %v218 = vrot.slane %v210, %v217
        %v220 = vmul.f32 %v218, %v213
        %v222 = vlaneseq
        %v223 = vshrl.u32 %v222, 7
        %v224 = vsub.s32 0, %v223
        %v225 = vrot.slane %v211, %v224
        %v227 = vadd.f32 %v220, %v225
        %228 = vst [vmem:[%s185] sm:$0xff] %v227
        %s229 = sand.u32 %s96, 1
        %s230 = scalar_lea.sflag [#allocation4], %s229
        %s231 = sand.u32 %s96, 1
        %s232 = smul.addr %s231, 8
        %s233 = scalar_lea.vmem [#allocation5], %s232
        // Predicated region
        $region37: #{tpu_custom_call.1} parent=31 // pred_check
          %p234 = pneg %p106
        $region38: #{tpu_custom_call.1} parent=31 // pred_check_branch
          %236 = sbr.rel (%p234) target = $region40
        $region39: #{tpu_custom_call.1} parent=31 // pred_region
          %s238 = ssub.s32 128, 128
          %239 = vsyncadd %s230, %s238
          %s240 = smul.addr %s20, 128
          %s241 = scalar_lea.hbm %s3, %s240
          %s243 = sshll.u32 %s233, 4
          %s244 = int_to_ptr.vmem [resolvable:$true] %s243
          %246 = dma.vmem_to_hbm [thread:$0]  %s244, 128, %s241, %s230
        $region40: #{tpu_custom_call.1} parent=31 // pred_fallthru
          _
      $region32: #{tpu_custom_call.1} parent=5 // pred_fallthru
        _
      %p247 = scmp.le.s32.totalorder 2, %s15
      // Predicated region
      $region41: #{tpu_custom_call.1} parent=5 // pred_check
        %p248 = pneg %p247
      $region42: #{tpu_custom_call.1} parent=5 // pred_check_branch
        %250 = sbr.rel (%p248) target = $region44
      $region43: #{tpu_custom_call.1} parent=5 // pred_region
        %s251 = ssub.s32 %s15, 2
        // Predicated region
        $region45: #{tpu_custom_call.1} parent=43 // pred_check
          %p252 = pneg %p112
        $region46: #{tpu_custom_call.1} parent=43 // pred_check_branch
          %254 = sbr.rel (%p252) target = $region48
        $region47: #{tpu_custom_call.1} parent=43 // pred_region
          %s255 = sand.u32 %s97, 1
          %s256 = scalar_lea.sflag [#allocation4], %s255
          %s257 = sand.u32 %s97, 1
          %s258 = smul.addr %s257, 8
          %s259 = scalar_lea.vmem [#allocation5], %s258
          %260 = dma.done %s256, 128
        $region48: #{tpu_custom_call.1} parent=43 // pred_fallthru
          _
      $region44: #{tpu_custom_call.1} parent=5 // pred_fallthru
        _
    $region6: #{tpu_custom_call.1} parent=1 // loop_footer
      %s19 = sadd.s32 1, %s15
    $region7: #{tpu_custom_call.1} parent=1 // loop_footer_branch
      %14 = sbr.rel target = $region3
    $region8: #{tpu_custom_call.1} parent=1 // loop_exit
      _
    %261 = vsyncpa [#allocation3], 1
    %s262 = scalar_lea.sflag [#allocation3], 1
    %263 = vsyncpa %s262, 1
    %264 = vsyncpa [#allocation4], 1
    %s265 = scalar_lea.sflag [#allocation4], 1
    %266 = vsyncpa %s265, 1

</llo_original>
